<compile_context>
chip_gen: v6e
topology: v6e:2x2x1
jax: 0.10.0
libtpu: 0.0.40
codegen_flags: <defaults>
</compile_context>

<pallas_src>
import functools

import jax
import jax.numpy as jnp
from jax.experimental import pallas as pl
from jax.experimental.pallas import tpu as pltpu

LANE = 128


def _round_up(v, m):
    return (v + m - 1) // m * m


# ---------------------------------------------------------------------------
# Fused Pallas kernel: all SAGEConv layers in one invocation
# ---------------------------------------------------------------------------
def fused_sage_kernel(a_ref, x_ref, w_ref, b_ref, o_ref, *, num_layers):
    a = a_ref[...]                       # (Np, Np)  bf16, normalized adjacency
    h = x_ref[...]                       # (Np, Cp)  bf16, node features
    for li in range(num_layers):         # unrolled at trace time
        # mean-neighbor aggregation as a dense MXU matmul (f32 accumulation)
        agg = jnp.dot(a, h, preferred_element_type=jnp.float32)
        # fused lin_l / lin_r projection: [agg, h] @ [Wl; Wr]  (K = 2*Cp)
        cat = jnp.concatenate([agg.astype(jnp.bfloat16), h], axis=-1)
        out = jnp.dot(cat, w_ref[li], preferred_element_type=jnp.float32)
        out = out + b_ref[li]            # (1, Cp) lane-dense broadcast add, f32
        if li < num_layers - 1:
            # ReLU; dropout is identity in eval mode
            h = jnp.maximum(out, 0.0).astype(jnp.bfloat16)
        else:
            o_ref[...] = out.astype(o_ref.dtype)


def fused_sage_call(A, x, W, b):
    num_layers = W.shape[0]
    Np = A.shape[0]
    Cp = x.shape[1]
    kernel = functools.partial(fused_sage_kernel, num_layers=num_layers)
    return pl.pallas_call(
        kernel,
        out_shape=jax.ShapeDtypeStruct((Np, Cp), jnp.float32),
        grid=(1,),
        in_specs=[
            pl.BlockSpec((Np, Np), lambda i: (0, 0)),                      # A (bf16)
            pl.BlockSpec((Np, Cp), lambda i: (0, 0)),                      # x (bf16)
            pl.BlockSpec((num_layers, 2 * Cp, Cp), lambda i: (0, 0, 0)),   # W (bf16)
            pl.BlockSpec((num_layers, 1, Cp), lambda i: (0, 0, 0)),        # b (f32)
        ],
        out_specs=pl.BlockSpec((Np, Cp), lambda i: (0, 0)),
        compiler_params=pltpu.CompilerParams(
            dimension_semantics=("arbitrary",),
            vmem_limit_bytes=64 * 1024 * 1024,
        ),
    )(A, x, W, b)


# ---------------------------------------------------------------------------
# Host-side packing: dense normalized adjacency + padded / fused parameters
# ---------------------------------------------------------------------------
def build_mean_adjacency(edge_index, num_nodes, n_pad):
    src = edge_index[0]
    dst = edge_index[1]
    A = jnp.zeros((n_pad, n_pad), dtype=jnp.float32)
    A = A.at[dst, src].add(1.0)
    deg = A.sum(axis=1, keepdims=True)
    # nodes with no in-edges -> aggregated feature = 0 (matches scatter-mean)
    return A / jnp.maximum(deg, 1.0)


def prepare_packed_inputs(params, x, edge_index):
    N, c_in = x.shape
    max_c = max([c_in] + [Wl.shape[1] for (Wl, _, _) in params])
    Cp = _round_up(max_c, LANE)
    Np = _round_up(N, LANE)

    A = build_mean_adjacency(edge_index, N, Np).astype(jnp.bfloat16)
    xp = jnp.zeros((Np, Cp), jnp.float32).at[:N, :c_in].set(x).astype(jnp.bfloat16)

    Ws, bs = [], []
    for (Wl, Wr, b) in params:
        cin, cout = Wl.shape
        Wl_p = jnp.zeros((Cp, Cp), jnp.float32).at[:cin, :cout].set(Wl)
        Wr_p = jnp.zeros((Cp, Cp), jnp.float32).at[:cin, :cout].set(Wr)
        Ws.append(jnp.concatenate([Wl_p, Wr_p], axis=0))              # (2Cp, Cp)
        bs.append(jnp.zeros((1, Cp), jnp.float32).at[0, :cout].set(b.reshape(-1)))
    W = jnp.stack(Ws).astype(jnp.bfloat16)                            # (L, 2Cp, Cp)
    b = jnp.stack(bs)                                                 # (L, 1, Cp)
    return A, xp, W, b


def graphsage_forward(params, x, edge_index, edge_attr):
    del edge_attr  # unused in the reference forward
    N = x.shape[0]
    out_c = params[-1][0].shape[1]
    A, xp, W, b = prepare_packed_inputs(params, x, edge_index)
    out_pad = fused_sage_call(A, xp, W, b)
    return out_pad[:N, :out_c]


# ---------------------------------------------------------------------------
# Parameter init (weights stored pre-transposed as (C_in, C_out))
# ---------------------------------------------------------------------------
def init_sage_params(key, in_channels, hidden_channels, out_channels, num_layers=3):
    dims = [in_channels] + [hidden_channels] * (num_layers - 1) + [out_channels]
    params = []
    for li in range(num_layers):
        cin, cout = dims[li], dims[li + 1]
        k1, k2, k3, key = jax.random.split(key, 4)
        bound = 1.0 / jnp.sqrt(jnp.float32(cin))
        Wl = jax.random.uniform(k1, (cin, cout), jnp.float32, -bound, bound)
        Wr = jax.random.uniform(k2, (cin, cout), jnp.float32, -bound, bound)
        b = jax.random.uniform(k3, (cout,), jnp.float32, -bound, bound)
        params.append((Wl, Wr, b))
    return params


# ---------------------------------------------------------------------------
# References
# ---------------------------------------------------------------------------
def graphsage_forward_ref_matched(params, x, edge_index, edge_attr):
    """Plain-JAX reference with the SAME bf16 casts as the kernel (tight check)."""
    del edge_attr
    N = x.shape[0]
    out_c = params[-1][0].shape[1]
    A, h, W, b = prepare_packed_inputs(params, x, edge_index)
    num_layers = W.shape[0]
    out = None
    for li in range(num_layers):
        agg = jnp.dot(A, h, preferred_element_type=jnp.float32)
        cat = jnp.concatenate([agg.astype(jnp.bfloat16), h], axis=-1)
        out = jnp.dot(cat, W[li], preferred_element_type=jnp.float32) + b[li]
        if li < num_layers - 1:
            h = jnp.maximum(out, 0.0).astype(jnp.bfloat16)
    return out[:N, :out_c]


def graphsage_forward_ref_f32(params, x, edge_index, edge_attr):
    """Full-f32 PyG-semantics reference (loose sanity check vs bf16 kernel)."""
    del edge_attr
    N = x.shape[0]
    src, dst = edge_index[0], edge_index[1]
    A = jnp.zeros((N, N), jnp.float32).at[dst, src].add(1.0)
    A = A / jnp.maximum(A.sum(axis=1, keepdims=True), 1.0)
    num_layers = len(params)
    out = x
    for i, (Wl, Wr, b) in enumerate(params):
        out = (A @ x) @ Wl + x @ Wr + b.reshape(1, -1)
        if i < num_layers - 1:
            out = jnp.maximum(out, 0.0)
        x = out
    return out


if __name__ == "__main__":
    key = jax.random.PRNGKey(0)
    k_x, k_e, k_a, k_p = jax.random.split(key, 4)

    N = 64            # number of graph nodes
    E = 256           # number of edges
    IN_C = 16
    HID_C = 32
    OUT_C = 8

    x = jax.random.normal(k_x, (N, IN_C), dtype=jnp.float32)
    edge_index = jax.random.randint(k_e, (2, E), 0, N, dtype=jnp.int32)
    edge_attr = jax.random.normal(k_a, (E, 4), dtype=jnp.float32)  # unused

    params = init_sage_params(k_p, IN_C, HID_C, OUT_C, num_layers=3)

    out = jax.block_until_ready(graphsage_forward(params, x, edge_index, edge_attr))
    assert out.shape == (N, OUT_C), out.shape

    # Tight check against a plain-JAX reference with identical bf16 numerics.
    ref_m = jax.block_until_ready(
        graphsage_forward_ref_matched(params, x, edge_index, edge_attr))
    assert jnp.allclose(out, ref_m, atol=2e-3, rtol=2e-3), \
        "mismatch vs matched bf16 JAX reference"

    # Loose sanity check against the full-f32 PyG-semantics reference
    # (difference is only bf16 rounding of A / activations / weights).
    ref_f = jax.block_until_ready(
        graphsage_forward_ref_f32(params, x, edge_index, edge_attr))
    assert jnp.allclose(out, ref_f, atol=7.5e-2, rtol=7.5e-2), \
        "mismatch vs f32 PyG-semantics reference"

    print("KERNEL_OK")
</pallas_src>

<mosaic_0001>
module attributes {stable_mosaic.version = 11 : i64} {
  func.func @fused_sage_kernel(%arg0: i32, %arg1: memref<128x128xbf16, #tpu.memory_space<vmem>>, %arg2: memref<128x128xbf16, #tpu.memory_space<vmem>>, %arg3: memref<3x256x128xbf16, #tpu.memory_space<vmem>>, %arg4: memref<3x1x128xf32, #tpu.memory_space<vmem>>, %arg5: memref<128x128xf32, #tpu.memory_space<vmem>>) attributes {dimension_semantics = [#tpu.dimension_semantics<arbitrary>], iteration_bounds = array<i64: 1>, scalar_prefetch = 0 : i64, scratch_operands = 0 : i64, tpu.core_type = #tpu.core_type<tc>, window_params = [{pipeline_mode = #tpu.pipeline_mode<synchronous>, transform_indices = @transform_0, window_bounds = array<i64: 128, 128>}, {pipeline_mode = #tpu.pipeline_mode<synchronous>, transform_indices = @transform_1, window_bounds = array<i64: 128, 128>}, {pipeline_mode = #tpu.pipeline_mode<synchronous>, transform_indices = @transform_2, window_bounds = array<i64: 3, 256, 128>}, {pipeline_mode = #tpu.pipeline_mode<synchronous>, transform_indices = @transform_3, window_bounds = array<i64: 3, 1, 128>}, {pipeline_mode = #tpu.pipeline_mode<synchronous>, transform_indices = @transform_4, window_bounds = array<i64: 128, 128>}]} {
    %c0 = arith.constant 0 : index
    %c0_0 = arith.constant 0 : index
    %0 = vector.load %arg1[%c0, %c0_0] : memref<128x128xbf16, #tpu.memory_space<vmem>>, vector<128x128xbf16>
    %c0_1 = arith.constant 0 : index
    %c0_2 = arith.constant 0 : index
    %1 = vector.load %arg2[%c0_1, %c0_2] : memref<128x128xbf16, #tpu.memory_space<vmem>>, vector<128x128xbf16>
    %cst = arith.constant dense<0.000000e+00> : vector<128x128xf32>
    %2 = tpu.matmul %0, %1, %cst {dimension_numbers = #tpu.dot_dimension_numbers<[1], [0], [0], [1], [0, 0, 1, 1], [], []>} : vector<128x128xbf16>, vector<128x128xbf16>, vector<128x128xf32> -> vector<128x128xf32>
    %3 = arith.truncf %2 : vector<128x128xf32> to vector<128x128xbf16>
    %4 = tpu.concatenate %3, %1 in 1 : vector<128x128xbf16>, vector<128x128xbf16> -> vector<128x256xbf16>
    %c0_3 = arith.constant 0 : index
    %c0_4 = arith.constant 0 : index
    %c0_5 = arith.constant 0 : index
    %5 = vector.load %arg3[%c0_3, %c0_4, %c0_5] : memref<3x256x128xbf16, #tpu.memory_space<vmem>>, vector<1x256x128xbf16>
    %6 = vector.shape_cast %5 : vector<1x256x128xbf16> to vector<256x128xbf16>
    %cst_6 = arith.constant dense<0.000000e+00> : vector<128x128xf32>
    %7 = tpu.matmul %4, %6, %cst_6 {dimension_numbers = #tpu.dot_dimension_numbers<[1], [0], [0], [1], [0, 0, 1, 1], [], []>} : vector<128x256xbf16>, vector<256x128xbf16>, vector<128x128xf32> -> vector<128x128xf32>
    %c0_7 = arith.constant 0 : index
    %c0_8 = arith.constant 0 : index
    %c0_9 = arith.constant 0 : index
    %8 = vector.load %arg4[%c0_7, %c0_8, %c0_9] : memref<3x1x128xf32, #tpu.memory_space<vmem>>, vector<1x1x128xf32>
    %9 = vector.shape_cast %8 : vector<1x1x128xf32> to vector<1x128xf32>
    %10 = vector.broadcast %9 : vector<1x128xf32> to vector<128x128xf32>
    %11 = arith.addf %7, %10 : vector<128x128xf32>
    %cst_10 = arith.constant 0.000000e+00 : f32
    %12 = vector.broadcast %cst_10 : f32 to vector<128x128xf32>
    %13 = arith.maximumf %11, %12 : vector<128x128xf32>
    %14 = arith.truncf %13 : vector<128x128xf32> to vector<128x128xbf16>
    %cst_11 = arith.constant dense<0.000000e+00> : vector<128x128xf32>
    %15 = tpu.matmul %0, %14, %cst_11 {dimension_numbers = #tpu.dot_dimension_numbers<[1], [0], [0], [1], [0, 0, 1, 1], [], []>} : vector<128x128xbf16>, vector<128x128xbf16>, vector<128x128xf32> -> vector<128x128xf32>
    %16 = arith.truncf %15 : vector<128x128xf32> to vector<128x128xbf16>
    %17 = tpu.concatenate %16, %14 in 1 : vector<128x128xbf16>, vector<128x128xbf16> -> vector<128x256xbf16>
    %c1 = arith.constant 1 : index
    %c0_12 = arith.constant 0 : index
    %c0_13 = arith.constant 0 : index
    %18 = vector.load %arg3[%c1, %c0_12, %c0_13] : memref<3x256x128xbf16, #tpu.memory_space<vmem>>, vector<1x256x128xbf16>
    %19 = vector.shape_cast %18 : vector<1x256x128xbf16> to vector<256x128xbf16>
    %cst_14 = arith.constant dense<0.000000e+00> : vector<128x128xf32>
    %20 = tpu.matmul %17, %19, %cst_14 {dimension_numbers = #tpu.dot_dimension_numbers<[1], [0], [0], [1], [0, 0, 1, 1], [], []>} : vector<128x256xbf16>, vector<256x128xbf16>, vector<128x128xf32> -> vector<128x128xf32>
    %c1_15 = arith.constant 1 : index
    %c0_16 = arith.constant 0 : index
    %c0_17 = arith.constant 0 : index
    %21 = vector.load %arg4[%c1_15, %c0_16, %c0_17] : memref<3x1x128xf32, #tpu.memory_space<vmem>>, vector<1x1x128xf32>
    %22 = vector.shape_cast %21 : vector<1x1x128xf32> to vector<1x128xf32>
    %23 = vector.broadcast %22 : vector<1x128xf32> to vector<128x128xf32>
    %24 = arith.addf %20, %23 : vector<128x128xf32>
    %cst_18 = arith.constant 0.000000e+00 : f32
    %25 = vector.broadcast %cst_18 : f32 to vector<128x128xf32>
    %26 = arith.maximumf %24, %25 : vector<128x128xf32>
    %27 = arith.truncf %26 : vector<128x128xf32> to vector<128x128xbf16>
    %cst_19 = arith.constant dense<0.000000e+00> : vector<128x128xf32>
    %28 = tpu.matmul %0, %27, %cst_19 {dimension_numbers = #tpu.dot_dimension_numbers<[1], [0], [0], [1], [0, 0, 1, 1], [], []>} : vector<128x128xbf16>, vector<128x128xbf16>, vector<128x128xf32> -> vector<128x128xf32>
    %29 = arith.truncf %28 : vector<128x128xf32> to vector<128x128xbf16>
    %30 = tpu.concatenate %29, %27 in 1 : vector<128x128xbf16>, vector<128x128xbf16> -> vector<128x256xbf16>
    %c2 = arith.constant 2 : index
    %c0_20 = arith.constant 0 : index
    %c0_21 = arith.constant 0 : index
    %31 = vector.load %arg3[%c2, %c0_20, %c0_21] : memref<3x256x128xbf16, #tpu.memory_space<vmem>>, vector<1x256x128xbf16>
    %32 = vector.shape_cast %31 : vector<1x256x128xbf16> to vector<256x128xbf16>
    %cst_22 = arith.constant dense<0.000000e+00> : vector<128x128xf32>
    %33 = tpu.matmul %30, %32, %cst_22 {dimension_numbers = #tpu.dot_dimension_numbers<[1], [0], [0], [1], [0, 0, 1, 1], [], []>} : vector<128x256xbf16>, vector<256x128xbf16>, vector<128x128xf32> -> vector<128x128xf32>
    %c2_23 = arith.constant 2 : index
    %c0_24 = arith.constant 0 : index
    %c0_25 = arith.constant 0 : index
    %34 = vector.load %arg4[%c2_23, %c0_24, %c0_25] : memref<3x1x128xf32, #tpu.memory_space<vmem>>, vector<1x1x128xf32>
    %35 = vector.shape_cast %34 : vector<1x1x128xf32> to vector<1x128xf32>
    %36 = vector.broadcast %35 : vector<1x128xf32> to vector<128x128xf32>
    %37 = arith.addf %33, %36 : vector<128x128xf32>
    %c0_26 = arith.constant 0 : index
    %c0_27 = arith.constant 0 : index
    %38 = vector.load %arg5[%c0_26, %c0_27] : memref<128x128xf32, #tpu.memory_space<vmem>>, vector<128x128xf32>
    tpu.vector_store %arg5[%c0_26, %c0_27], %37 {strides = array<i32>} : memref<128x128xf32, #tpu.memory_space<vmem>>, vector<128x128xf32>,
    return
  }
  func.func @transform_0(%arg0: i32) -> (i32, i32) {
    %c0_i32 = arith.constant 0 : i32
    %c0_i32_0 = arith.constant 0 : i32
    %c0_i32_1 = arith.constant 0 : i32
    return %c0_i32, %c0_i32_0 : i32, i32
  }
  func.func @transform_1(%arg0: i32) -> (i32, i32) {
    %c0_i32 = arith.constant 0 : i32
    %c0_i32_0 = arith.constant 0 : i32
    %c0_i32_1 = arith.constant 0 : i32
    return %c0_i32, %c0_i32_0 : i32, i32
  }
  func.func @transform_2(%arg0: i32) -> (i32, i32, i32) {
    %c0_i32 = arith.constant 0 : i32
    %c0_i32_0 = arith.constant 0 : i32
    %c0_i32_1 = arith.constant 0 : i32
    %c0_i32_2 = arith.constant 0 : i32
    return %c0_i32, %c0_i32_0, %c0_i32_1 : i32, i32, i32
  }
  func.func @transform_3(%arg0: i32) -> (i32, i32, i32) {
    %c0_i32 = arith.constant 0 : i32
    %c0_i32_0 = arith.constant 0 : i32
    %c0_i32_1 = arith.constant 0 : i32
    %c0_i32_2 = arith.constant 0 : i32
    return %c0_i32, %c0_i32_0, %c0_i32_1 : i32, i32, i32
  }
  func.func @transform_4(%arg0: i32) -> (i32, i32) {
    %c0_i32 = arith.constant 0 : i32
    %c0_i32_0 = arith.constant 0 : i32
    %c0_i32_1 = arith.constant 0 : i32
    return %c0_i32, %c0_i32_0 : i32, i32
  }
}

</mosaic_0001>

<llo_original>
// kernel: tpu_custom_call.1
$region0: #{tpu_custom_call.1}
  #allocation0 [shape = 'u32[]', space=smem, size = 0x4, offset = 0x4, fixed_abs, tag = 'smem constant byte address 0x4 - core index']
  #allocation1 [shape = 'u32[144,128]{1,0:T(1,128)}', space=vmem, size = 0x12000, scoped, tag = 'internal scratch']
  %s0 = inlined_call_operand.hbm [shape: bf16[128,128], index: 0, kind: input, shape index: {}]
  %s1 = inlined_call_operand.hbm [shape: bf16[128,128], index: 1, kind: input, shape index: {}]
  %s2 = inlined_call_operand.hbm [shape: bf16[3,256,128], index: 2, kind: input, shape index: {}]
  %s3 = inlined_call_operand.vmem [shape: f32[3,1,128], index: 3, kind: input, shape index: {}]
  %s4 = inlined_call_operand.hbm [shape: f32[128,128], index: 4, kind: output, shape index: {}]
  %s5 = sld [smem:[#allocation0]]
  $region38: #{tpu_custom_call.1} parent=0
    _
  %s7 = ssub.s32 1, %s5
  %s8 = scalar_select 0, %s7, %s5
  $region1: #{tpu_custom_call.1} parent=0
    #allocation2 [shape = 'u8[32768]{0}', space=vmem, size = 0x8000, scoped, tag = 'input window, operand 0, single buffered']
    #allocation3 [shape = 's32[1]{0}', space=sflag, size = 0x4, scoped, tag = 'scoped memory for tpu_custom_call.1']
    #allocation4 [shape = 's32[1]{0}', space=sflag, size = 0x4, scoped, tag = 'scoped memory for tpu_custom_call.1']
    #allocation5 [shape = 'u8[32768]{0}', space=vmem, size = 0x8000, scoped, tag = 'input window, operand 1, single buffered']
    #allocation6 [shape = 's32[1]{0}', space=sflag, size = 0x4, scoped, tag = 'scoped memory for tpu_custom_call.1']
    #allocation7 [shape = 'u8[196608]{0}', space=vmem, size = 0x30000, scoped, tag = 'input window, operand 2, single buffered']
    #allocation8 [shape = 'u8[65536]{0}', space=vmem, size = 0x10000, scoped, tag = 'output window, operand 0, single buffered']
    %9 = vsyncpa [#allocation3], 0
    %10 = vsyncpa [#allocation6], 0
    %11 = vsyncpa [#allocation4], 0
    // Predicated region
    $region2: #{tpu_custom_call.1} parent=1 // pred_check
      _
    $region3: #{tpu_custom_call.1} parent=1 // pred_check_branch
      %13 = sbr.rel (0) target = $region5
    $region4: #{tpu_custom_call.1} parent=1 // pred_region
      %s15 = ssub.s32 1024, 1024
      %16 = vsyncadd [#allocation3], %s15
      %s17 = sshll.u32 [#allocation2], 4
      %s18 = int_to_ptr.vmem [resolvable:$true] %s17
      %23 = dma.hbm_to_vmem [thread:$0]  %s0, 1024, %s18, [#allocation3], 64, 64, 4
    $region5: #{tpu_custom_call.1} parent=1 // pred_fallthru
      _
    // Predicated region
    $region6: #{tpu_custom_call.1} parent=1 // pred_check
      _
    $region7: #{tpu_custom_call.1} parent=1 // pred_check_branch
      %25 = sbr.rel (0) target = $region9
    $region8: #{tpu_custom_call.1} parent=1 // pred_region
      %s27 = ssub.s32 1024, 1024
      %28 = vsyncadd [#allocation6], %s27
      %s29 = sshll.u32 [#allocation5], 4
      %s30 = int_to_ptr.vmem [resolvable:$true] %s29
      %35 = dma.hbm_to_vmem [thread:$0]  %s1, 1024, %s30, [#allocation6], 64, 64, 4
    $region9: #{tpu_custom_call.1} parent=1 // pred_fallthru
      _
    // Predicated region
    $region10: #{tpu_custom_call.1} parent=1 // pred_check
      _
    $region11: #{tpu_custom_call.1} parent=1 // pred_check_branch
      %37 = sbr.rel (0) target = $region13
    $region12: #{tpu_custom_call.1} parent=1 // pred_region
      %s39 = ssub.s32 6144, 6144
      %40 = vsyncadd [#allocation6], %s39
      %s41 = sshll.u32 [#allocation7], 4
      %s42 = int_to_ptr.vmem [resolvable:$true] %s41
      %47 = dma.hbm_to_vmem [thread:$0]  %s2, 6144, %s42, [#allocation6], 64, 64, 4
    $region13: #{tpu_custom_call.1} parent=1 // pred_fallthru
      _
    // Predicated region
    $region14: #{tpu_custom_call.1} parent=1 // pred_check
      _
    $region15: #{tpu_custom_call.1} parent=1 // pred_check_branch
      %49 = sbr.rel (0) target = $region17
    $region16: #{tpu_custom_call.1} parent=1 // pred_region
      _
    $region17: #{tpu_custom_call.1} parent=1 // pred_fallthru
      _
    // Predicated region
    $region18: #{tpu_custom_call.1} parent=1 // pred_check
      _
    $region19: #{tpu_custom_call.1} parent=1 // pred_check_branch
      %51 = sbr.rel (0) target = $region21
    $region20: #{tpu_custom_call.1} parent=1 // pred_region
      %52 = dma.done [#allocation3], 1024
    $region21: #{tpu_custom_call.1} parent=1 // pred_fallthru
      _
    // Predicated region
    $region22: #{tpu_custom_call.1} parent=1 // pred_check
      _
    $region23: #{tpu_custom_call.1} parent=1 // pred_check_branch
      %54 = sbr.rel (0) target = $region25
    $region24: #{tpu_custom_call.1} parent=1 // pred_region
      %55 = dma.done [#allocation6], 1024
    $region25: #{tpu_custom_call.1} parent=1 // pred_fallthru
      _
    // Predicated region
    $region26: #{tpu_custom_call.1} parent=1 // pred_check
      _
    $region27: #{tpu_custom_call.1} parent=1 // pred_check_branch
      %57 = sbr.rel (0) target = $region29
    $region28: #{tpu_custom_call.1} parent=1 // pred_region
      %58 = dma.done [#allocation6], 6144
    $region29: #{tpu_custom_call.1} parent=1 // pred_fallthru
      _
    %v60 = vld [vmem:[#allocation2] sm:$0xf]
    %v61 = vld [vmem:[#allocation2 + $0x4] sm:$0xf]
    %v62 = vld [vmem:[#allocation2 + $0x8] sm:$0xf]
    %v63 = vld [vmem:[#allocation2 + $0xc] sm:$0xf]
    %v64 = vld [vmem:[#allocation2 + $0x10] sm:$0xf]
    %v65 = vld [vmem:[#allocation2 + $0x14] sm:$0xf]
    %v66 = vld [vmem:[#allocation2 + $0x18] sm:$0xf]
    %v67 = vld [vmem:[#allocation2 + $0x1c] sm:$0xf]
    %v68 = vld [vmem:[#allocation2 + $0x20] sm:$0xf]
    %v69 = vld [vmem:[#allocation2 + $0x24] sm:$0xf]
    %v70 = vld [vmem:[#allocation2 + $0x28] sm:$0xf]
    %v71 = vld [vmem:[#allocation2 + $0x2c] sm:$0xf]
    %v72 = vld [vmem:[#allocation2 + $0x30] sm:$0xf]
    %v73 = vld [vmem:[#allocation2 + $0x34] sm:$0xf]
    %v74 = vld [vmem:[#allocation2 + $0x38] sm:$0xf]
    %v75 = vld [vmem:[#allocation2 + $0x3c] sm:$0xf]
    %v76 = vld [vmem:[#allocation5] sm:$0xf]
    %v77 = vld [vmem:[#allocation5 + $0x4] sm:$0xf]
    %v78 = vld [vmem:[#allocation5 + $0x8] sm:$0xf]
    %v79 = vld [vmem:[#allocation5 + $0xc] sm:$0xf]
    %v80 = vld [vmem:[#allocation5 + $0x10] sm:$0xf]
    %v81 = vld [vmem:[#allocation5 + $0x14] sm:$0xf]
    %v82 = vld [vmem:[#allocation5 + $0x18] sm:$0xf]
    %v83 = vld [vmem:[#allocation5 + $0x1c] sm:$0xf]
    %v84 = vld [vmem:[#allocation5 + $0x20] sm:$0xf]
    %v85 = vld [vmem:[#allocation5 + $0x24] sm:$0xf]
    %v86 = vld [vmem:[#allocation5 + $0x28] sm:$0xf]
    %v87 = vld [vmem:[#allocation5 + $0x2c] sm:$0xf]
    %v88 = vld [vmem:[#allocation5 + $0x30] sm:$0xf]
    %v89 = vld [vmem:[#allocation5 + $0x34] sm:$0xf]
    %v90 = vld [vmem:[#allocation5 + $0x38] sm:$0xf]
    %v91 = vld [vmem:[#allocation5 + $0x3c] sm:$0xf]
    %v108 = vunpack.c.l.b16 %v60
    %v109 = vunpack.c.l.b16 %v61
    %v110 = vunpack.c.l.b16 %v62
    %v111 = vunpack.c.l.b16 %v63
    %v112 = vunpack.c.l.b16 %v64
    %v113 = vunpack.c.l.b16 %v65
    %v114 = vunpack.c.l.b16 %v66
    %v115 = vunpack.c.l.b16 %v67
    %v116 = vunpack.c.l.b16 %v68
    %v117 = vunpack.c.l.b16 %v69
    %v118 = vunpack.c.l.b16 %v70
    %v119 = vunpack.c.l.b16 %v71
    %v120 = vunpack.c.l.b16 %v72
    %v121 = vunpack.c.l.b16 %v73
    %v122 = vunpack.c.l.b16 %v74
    %v123 = vunpack.c.l.b16 %v75
    %v124 = vpack.c.b16 %v109, %v108
    %v125 = vpack.c.b16 %v111, %v110
    %v126 = vpack.c.b16 %v113, %v112
    %v127 = vpack.c.b16 %v115, %v114
    %v128 = vpack.c.b16 %v117, %v116
    %v129 = vpack.c.b16 %v119, %v118
    %v130 = vpack.c.b16 %v121, %v120
    %v131 = vpack.c.b16 %v123, %v122
    %v156 = vunpack.c.l.b16 %v76
    %v157 = vunpack.c.l.b16 %v77
    %v158 = vunpack.c.l.b16 %v78
    %v159 = vunpack.c.l.b16 %v79
    %v160 = vunpack.c.l.b16 %v80
    %v161 = vunpack.c.l.b16 %v81
    %v162 = vunpack.c.l.b16 %v82
    %v163 = vunpack.c.l.b16 %v83
    %v164 = vunpack.c.l.b16 %v84
    %v165 = vunpack.c.l.b16 %v85
    %v166 = vunpack.c.l.b16 %v86
    %v167 = vunpack.c.l.b16 %v87
    %v168 = vunpack.c.l.b16 %v88
    %v169 = vunpack.c.l.b16 %v89
    %v170 = vunpack.c.l.b16 %v90
    %v171 = vunpack.c.l.b16 %v91
    %v172 = vpack.c.b16 %v157, %v156
    %v173 = vpack.c.b16 %v159, %v158
    %v174 = vpack.c.b16 %v161, %v160
    %v175 = vpack.c.b16 %v163, %v162
    %v176 = vpack.c.b16 %v165, %v164
    %v177 = vpack.c.b16 %v167, %v166
    %v178 = vpack.c.b16 %v169, %v168
    %v179 = vpack.c.b16 %v171, %v170
    %188 = vmatprep.subr.bf16.mxu0 0
    %189 = vmatpush1.bf16.msra.mxu0 %v179
    %190 = vmatprep.subr.bf16.mxu0 0
    %191 = vmatpush1.bf16.msra.mxu0 %v178
    %192 = vmatprep.subr.bf16.mxu0 0
    %193 = vmatpush1.bf16.msra.mxu0 %v177
    %194 = vmatprep.subr.bf16.mxu0 0
    %195 = vmatpush1.bf16.msra.mxu0 %v176
    %196 = vmatprep.subr.bf16.mxu0 0
    %197 = vmatpush1.bf16.msra.mxu0 %v175
    %198 = vmatprep.subr.bf16.mxu0 0
    %199 = vmatpush1.bf16.msra.mxu0 %v174
    %200 = vmatprep.subr.bf16.mxu0 0
    %201 = vmatpush1.bf16.msra.mxu0 %v173
    %202 = vmatprep.subr.bf16.mxu0 0
    %203 = vmatpush1.bf16.msra.mxu0 %v172
    %204 = vmatprep.subr.bf16.mxu0 0
    %205 = vmatpush2.bf16.msra.mxu0 0
    %206 = vmatprep.subr.bf16.mxu0 0
    %207 = vmatpush2.bf16.msra.mxu0 0
    %208 = vmatprep.subr.bf16.mxu0 0
    %209 = vmatpush2.bf16.msra.mxu0 0
    %210 = vmatprep.subr.bf16.mxu0 0
    %211 = vmatpush2.bf16.msra.mxu0 0
    %212 = vmatprep.subr.bf16.mxu0 0
    %213 = vmatpush2.bf16.msra.mxu0 0
    %214 = vmatprep.subr.bf16.mxu0 0
    %215 = vmatpush2.bf16.msra.mxu0 0
    %216 = vmatprep.subr.bf16.mxu0 0
    %217 = vmatpush2.bf16.msra.mxu0 0
    %218 = vmatprep.subr.bf16.mxu0 0
    %219 = vmatpush2.bf16.msra.mxu0 0
    %220 = vmatprep.mubr.bf16.mxu0 0
    %221 = vmatmul.mubr.bf16.gmra.mxu0 %v124
    %v222 = vpop.f32.mrf.mxu0
    %v223 = vadd.f32 0.0, %v222
    %v224 = vpop.f32.mrf.mxu0
    %v225 = vpop.f32.mrf.mxu0
    %v226 = vadd.f32 0.0, %v225
    %v227 = vpop.f32.mrf.mxu0
    %228 = vmatprep.mubr.bf16.mxu0 0
    %229 = vmatmul.mubr.bf16.gmra.mxu0 %v125
    %v230 = vpop.f32.mrf.mxu0
    %v231 = vadd.f32 0.0, %v230
    %v232 = vpop.f32.mrf.mxu0
    %v233 = vpop.f32.mrf.mxu0
    %v234 = vadd.f32 0.0, %v233
    %v235 = vpop.f32.mrf.mxu0
    %236 = vmatprep.mubr.bf16.mxu0 0
    %237 = vmatmul.mubr.bf16.gmra.mxu0 %v126
    %v238 = vpop.f32.mrf.mxu0
    %v239 = vadd.f32 0.0, %v238
    %v240 = vpop.f32.mrf.mxu0
    %v241 = vpop.f32.mrf.mxu0
    %v242 = vadd.f32 0.0, %v241
    %v243 = vpop.f32.mrf.mxu0
    %244 = vmatprep.mubr.bf16.mxu0 0
    %245 = vmatmul.mubr.bf16.gmra.mxu0 %v127
    %v246 = vpop.f32.mrf.mxu0
    %v247 = vadd.f32 0.0, %v246
    %v248 = vpop.f32.mrf.mxu0
    %v249 = vpop.f32.mrf.mxu0
    %v250 = vadd.f32 0.0, %v249
    %v251 = vpop.f32.mrf.mxu0
    %252 = vmatprep.mubr.bf16.mxu0 0
    %253 = vmatmul.mubr.bf16.gmra.mxu0 %v128
    %v254 = vpop.f32.mrf.mxu0
    %v255 = vadd.f32 0.0, %v254
    %v256 = vpop.f32.mrf.mxu0
    %v257 = vpop.f32.mrf.mxu0
    %v258 = vadd.f32 0.0, %v257
    %v259 = vpop.f32.mrf.mxu0
    %260 = vmatprep.mubr.bf16.mxu0 0
    %261 = vmatmul.mubr.bf16.gmra.mxu0 %v129
    %v262 = vpop.f32.mrf.mxu0
    %v263 = vadd.f32 0.0, %v262
    %v264 = vpop.f32.mrf.mxu0
    %v265 = vpop.f32.mrf.mxu0
    %v266 = vadd.f32 0.0, %v265
    %v267 = vpop.f32.mrf.mxu0
    %268 = vmatprep.mubr.bf16.mxu0 0
    %269 = vmatmul.mubr.bf16.gmra.mxu0 %v130
    %v270 = vpop.f32.mrf.mxu0
    %v271 = vadd.f32 0.0, %v270
    %v272 = vpop.f32.mrf.mxu0
    %v273 = vpop.f32.mrf.mxu0
    %v274 = vadd.f32 0.0, %v273
    %v275 = vpop.f32.mrf.mxu0
    %276 = vmatprep.mubr.bf16.mxu0 0
    %277 = vmatmul.mubr.bf16.gmra.mxu0 %v131
    %v278 = vpop.f32.mrf.mxu0
    %v279 = vadd.f32 0.0, %v278
    %v280 = vpop.f32.mrf.mxu0
    %v281 = vpop.f32.mrf.mxu0
    %v282 = vadd.f32 0.0, %v281
    %v283 = vpop.f32.mrf.mxu0
    %284 = vdwg.mxu0
    %v285 = vpack.c.bf16 %v226, %v223
    %v286 = vpack.c.bf16 %v234, %v231
    %v287 = vpack.c.bf16 %v242, %v239
    %v288 = vpack.c.bf16 %v250, %v247
    %v289 = vpack.c.bf16 %v258, %v255
    %v290 = vpack.c.bf16 %v266, %v263
    %v291 = vpack.c.bf16 %v274, %v271
    %v292 = vpack.c.bf16 %v282, %v279
    %v293 = vld [vmem:[#allocation7] sm:$0xf]
    %v294 = vld [vmem:[#allocation7 + $0x4] sm:$0xf]
    %v295 = vld [vmem:[#allocation7 + $0x8] sm:$0xf]
    %v296 = vld [vmem:[#allocation7 + $0xc] sm:$0xf]
    %v297 = vld [vmem:[#allocation7 + $0x10] sm:$0xf]
    %v298 = vld [vmem:[#allocation7 + $0x14] sm:$0xf]
    %v299 = vld [vmem:[#allocation7 + $0x18] sm:$0xf]
    %v300 = vld [vmem:[#allocation7 + $0x1c] sm:$0xf]
    %v301 = vld [vmem:[#allocation7 + $0x20] sm:$0xf]
    %v302 = vld [vmem:[#allocation7 + $0x24] sm:$0xf]
    %v303 = vld [vmem:[#allocation7 + $0x28] sm:$0xf]
    %v304 = vld [vmem:[#allocation7 + $0x2c] sm:$0xf]
    %v305 = vld [vmem:[#allocation7 + $0x30] sm:$0xf]
    %v306 = vld [vmem:[#allocation7 + $0x34] sm:$0xf]
    %v307 = vld [vmem:[#allocation7 + $0x38] sm:$0xf]
    %v308 = vld [vmem:[#allocation7 + $0x3c] sm:$0xf]
    %v309 = vld [vmem:[#allocation7 + $0x40] sm:$0xf]
    %v310 = vld [vmem:[#allocation7 + $0x44] sm:$0xf]
    %v311 = vld [vmem:[#allocation7 + $0x48] sm:$0xf]
    %v312 = vld [vmem:[#allocation7 + $0x4c] sm:$0xf]
    %v313 = vld [vmem:[#allocation7 + $0x50] sm:$0xf]
    %v314 = vld [vmem:[#allocation7 + $0x54] sm:$0xf]
    %v315 = vld [vmem:[#allocation7 + $0x58] sm:$0xf]
    %v316 = vld [vmem:[#allocation7 + $0x5c] sm:$0xf]
    %v317 = vld [vmem:[#allocation7 + $0x60] sm:$0xf]
    %v318 = vld [vmem:[#allocation7 + $0x64] sm:$0xf]
    %v319 = vld [vmem:[#allocation7 + $0x68] sm:$0xf]
    %v320 = vld [vmem:[#allocation7 + $0x6c] sm:$0xf]
    %v321 = vld [vmem:[#allocation7 + $0x70] sm:$0xf]
    %v322 = vld [vmem:[#allocation7 + $0x74] sm:$0xf]
    %v323 = vld [vmem:[#allocation7 + $0x78] sm:$0xf]
    %v324 = vld [vmem:[#allocation7 + $0x7c] sm:$0xf]
    %v325 = vld [vmem:[%s3] sm:$0x1]
    %v327 = vlaneseq
    %v328 = vshrl.u32 %v327, 7
    %v329 = vsub.s32 0, %v328
    %v330 = vrot.slane %v325, %v329
    %v364 = vunpack.c.l.b16 %v293
    %v365 = vunpack.c.l.b16 %v294
    %v366 = vunpack.c.l.b16 %v295
    %v367 = vunpack.c.l.b16 %v296
    %v368 = vunpack.c.l.b16 %v297
    %v369 = vunpack.c.l.b16 %v298
    %v370 = vunpack.c.l.b16 %v299
    %v371 = vunpack.c.l.b16 %v300
    %v372 = vunpack.c.l.b16 %v301
    %v373 = vunpack.c.l.b16 %v302
    %v374 = vunpack.c.l.b16 %v303
    %v375 = vunpack.c.l.b16 %v304
    %v376 = vunpack.c.l.b16 %v305
    %v377 = vunpack.c.l.b16 %v306
    %v378 = vunpack.c.l.b16 %v307
    %v379 = vunpack.c.l.b16 %v308
    %v380 = vunpack.c.l.b16 %v309
    %v381 = vunpack.c.l.b16 %v310
    %v382 = vunpack.c.l.b16 %v311
    %v383 = vunpack.c.l.b16 %v312
    %v384 = vunpack.c.l.b16 %v313
    %v385 = vunpack.c.l.b16 %v314
    %v386 = vunpack.c.l.b16 %v315
    %v387 = vunpack.c.l.b16 %v316
    %v388 = vunpack.c.l.b16 %v317
    %v389 = vunpack.c.l.b16 %v318
    %v390 = vunpack.c.l.b16 %v319
    %v391 = vunpack.c.l.b16 %v320
    %v392 = vunpack.c.l.b16 %v321
    %v393 = vunpack.c.l.b16 %v322
    %v394 = vunpack.c.l.b16 %v323
    %v395 = vunpack.c.l.b16 %v324
    %v396 = vpack.c.b16 %v365, %v364
    %v397 = vpack.c.b16 %v367, %v366
    %v398 = vpack.c.b16 %v369, %v368
    %v399 = vpack.c.b16 %v371, %v370
    %v400 = vpack.c.b16 %v373, %v372
    %v401 = vpack.c.b16 %v375, %v374
    %v402 = vpack.c.b16 %v377, %v376
    %v403 = vpack.c.b16 %v379, %v378
    %v404 = vpack.c.b16 %v381, %v380
    %v405 = vpack.c.b16 %v383, %v382
    %v406 = vpack.c.b16 %v385, %v384
    %v407 = vpack.c.b16 %v387, %v386
    %v408 = vpack.c.b16 %v389, %v388
    %v409 = vpack.c.b16 %v391, %v390
    %v410 = vpack.c.b16 %v393, %v392
    %v411 = vpack.c.b16 %v395, %v394
    %428 = vmatprep.subr.bf16.mxu0 0
    %429 = vmatpush1.bf16.msra.mxu0 %v403
    %430 = vmatprep.subr.bf16.mxu0 0
    %431 = vmatpush1.bf16.msra.mxu0 %v402
    %432 = vmatprep.subr.bf16.mxu0 0
    %433 = vmatpush1.bf16.msra.mxu0 %v401
    %434 = vmatprep.subr.bf16.mxu0 0
    %435 = vmatpush1.bf16.msra.mxu0 %v400
    %436 = vmatprep.subr.bf16.mxu0 0
    %437 = vmatpush1.bf16.msra.mxu0 %v399
    %438 = vmatprep.subr.bf16.mxu0 0
    %439 = vmatpush1.bf16.msra.mxu0 %v398
    %440 = vmatprep.subr.bf16.mxu0 0
    %441 = vmatpush1.bf16.msra.mxu0 %v397
    %442 = vmatprep.subr.bf16.mxu0 0
    %443 = vmatpush1.bf16.msra.mxu0 %v396
    %444 = vmatprep.subr.bf16.mxu0 0
    %445 = vmatpush2.bf16.msra.mxu0 %v411
    %446 = vmatprep.subr.bf16.mxu0 0
    %447 = vmatpush2.bf16.msra.mxu0 %v410
    %448 = vmatprep.subr.bf16.mxu0 0
    %449 = vmatpush2.bf16.msra.mxu0 %v409
    %450 = vmatprep.subr.bf16.mxu0 0
    %451 = vmatpush2.bf16.msra.mxu0 %v408
    %452 = vmatprep.subr.bf16.mxu0 0
    %453 = vmatpush2.bf16.msra.mxu0 %v407
    %454 = vmatprep.subr.bf16.mxu0 0
    %455 = vmatpush2.bf16.msra.mxu0 %v406
    %456 = vmatprep.subr.bf16.mxu0 0
    %457 = vmatpush2.bf16.msra.mxu0 %v405
    %458 = vmatprep.subr.bf16.mxu0 0
    %459 = vmatpush2.bf16.msra.mxu0 %v404
    %460 = vmatprep.mubr.bf16.mxu0 %v172
    %461 = vmatmul.mubr.bf16.gmra.mxu0 %v285
    %v462 = vpop.f32.mrf.mxu0
    %v463 = vadd.f32 %v330, %v462
    %v464 = vpop.f32.mrf.mxu0
    %v465 = vpop.f32.mrf.mxu0
    %v466 = vadd.f32 %v330, %v465
    %v467 = vpop.f32.mrf.mxu0
    %468 = vmatprep.mubr.bf16.mxu0 %v173
    %469 = vmatmul.mubr.bf16.gmra.mxu0 %v286
    %v470 = vpop.f32.mrf.mxu0
    %v471 = vadd.f32 %v330, %v470
    %v472 = vpop.f32.mrf.mxu0
    %v473 = vpop.f32.mrf.mxu0
    %v474 = vadd.f32 %v330, %v473
    %v475 = vpop.f32.mrf.mxu0
    %476 = vmatprep.mubr.bf16.mxu0 %v174
    %477 = vmatmul.mubr.bf16.gmra.mxu0 %v287
    %v478 = vpop.f32.mrf.mxu0
    %v479 = vadd.f32 %v330, %v478
    %v480 = vpop.f32.mrf.mxu0
    %v481 = vpop.f32.mrf.mxu0
    %v482 = vadd.f32 %v330, %v481
    %v483 = vpop.f32.mrf.mxu0
    %484 = vmatprep.mubr.bf16.mxu0 %v175
    %485 = vmatmul.mubr.bf16.gmra.mxu0 %v288
    %v486 = vpop.f32.mrf.mxu0
    %v487 = vadd.f32 %v330, %v486
    %v488 = vpop.f32.mrf.mxu0
    %v489 = vpop.f32.mrf.mxu0
    %v490 = vadd.f32 %v330, %v489
    %v491 = vpop.f32.mrf.mxu0
    %492 = vmatprep.mubr.bf16.mxu0 %v176
    %493 = vmatmul.mubr.bf16.gmra.mxu0 %v289
    %v494 = vpop.f32.mrf.mxu0
    %v495 = vadd.f32 %v330, %v494
    %v496 = vpop.f32.mrf.mxu0
    %v497 = vpop.f32.mrf.mxu0
    %v498 = vadd.f32 %v330, %v497
    %v499 = vpop.f32.mrf.mxu0
    %500 = vmatprep.mubr.bf16.mxu0 %v177
    %501 = vmatmul.mubr.bf16.gmra.mxu0 %v290
    %v502 = vpop.f32.mrf.mxu0
    %v503 = vadd.f32 %v330, %v502
    %v504 = vpop.f32.mrf.mxu0
    %v505 = vpop.f32.mrf.mxu0
    %v506 = vadd.f32 %v330, %v505
    %v507 = vpop.f32.mrf.mxu0
    %508 = vmatprep.mubr.bf16.mxu0 %v178
    %509 = vmatmul.mubr.bf16.gmra.mxu0 %v291
    %v510 = vpop.f32.mrf.mxu0
    %v511 = vadd.f32 %v330, %v510
    %v512 = vpop.f32.mrf.mxu0
    %v513 = vpop.f32.mrf.mxu0
    %v514 = vadd.f32 %v330, %v513
    %v515 = vpop.f32.mrf.mxu0
    %516 = vmatprep.mubr.bf16.mxu0 %v179
    %517 = vmatmul.mubr.bf16.gmra.mxu0 %v292
    %v518 = vpop.f32.mrf.mxu0
    %v519 = vadd.f32 %v330, %v518
    %v520 = vpop.f32.mrf.mxu0
    %v521 = vpop.f32.mrf.mxu0
    %v522 = vadd.f32 %v330, %v521
    %v523 = vpop.f32.mrf.mxu0
    %524 = vdwg.mxu0
    %v525 = vmax.f32 %v463, 0.0
    %v526 = vmax.f32 %v466, 0.0
    %v527 = vmax.f32 %v471, 0.0
    %v528 = vmax.f32 %v474, 0.0
    %v529 = vmax.f32 %v479, 0.0
    %v530 = vmax.f32 %v482, 0.0
    %v531 = vmax.f32 %v487, 0.0
    %v532 = vmax.f32 %v490, 0.0
    %v533 = vmax.f32 %v495, 0.0
    %v534 = vmax.f32 %v498, 0.0
    %v535 = vmax.f32 %v503, 0.0
    %v536 = vmax.f32 %v506, 0.0
    %v537 = vmax.f32 %v511, 0.0
    %v538 = vmax.f32 %v514, 0.0
    %v539 = vmax.f32 %v519, 0.0
    %v540 = vmax.f32 %v522, 0.0
    %v541 = vpack.c.bf16 %v526, %v525
    %v542 = vpack.c.bf16 %v528, %v527
    %v543 = vpack.c.bf16 %v530, %v529
    %v544 = vpack.c.bf16 %v532, %v531
    %v545 = vpack.c.bf16 %v534, %v533
    %v546 = vpack.c.bf16 %v536, %v535
    %v547 = vpack.c.bf16 %v538, %v537
    %v548 = vpack.c.bf16 %v540, %v539
    %549 = vmatprep.subr.bf16.mxu0 0
    %550 = vmatpush1.bf16.msra.mxu0 %v548
    %551 = vmatprep.subr.bf16.mxu0 0
    %552 = vmatpush1.bf16.msra.mxu0 %v547
    %553 = vmatprep.subr.bf16.mxu0 0
    %554 = vmatpush1.bf16.msra.mxu0 %v546
    %555 = vmatprep.subr.bf16.mxu0 0
    %556 = vmatpush1.bf16.msra.mxu0 %v545
    %557 = vmatprep.subr.bf16.mxu0 0
    %558 = vmatpush1.bf16.msra.mxu0 %v544
    %559 = vmatprep.subr.bf16.mxu0 0
    %560 = vmatpush1.bf16.msra.mxu0 %v543
    %561 = vmatprep.subr.bf16.mxu0 0
    %562 = vmatpush1.bf16.msra.mxu0 %v542
    %563 = vmatprep.subr.bf16.mxu0 0
    %564 = vmatpush1.bf16.msra.mxu0 %v541
    %565 = vmatprep.subr.bf16.mxu0 0
    %566 = vmatpush2.bf16.msra.mxu0 0
    %567 = vmatprep.subr.bf16.mxu0 0
    %568 = vmatpush2.bf16.msra.mxu0 0
    %569 = vmatprep.subr.bf16.mxu0 0
    %570 = vmatpush2.bf16.msra.mxu0 0
    %571 = vmatprep.subr.bf16.mxu0 0
    %572 = vmatpush2.bf16.msra.mxu0 0
    %573 = vmatprep.subr.bf16.mxu0 0
    %574 = vmatpush2.bf16.msra.mxu0 0
    %575 = vmatprep.subr.bf16.mxu0 0
    %576 = vmatpush2.bf16.msra.mxu0 0
    %577 = vmatprep.subr.bf16.mxu0 0
    %578 = vmatpush2.bf16.msra.mxu0 0
    %579 = vmatprep.subr.bf16.mxu0 0
    %580 = vmatpush2.bf16.msra.mxu0 0
    %581 = vmatprep.mubr.bf16.mxu0 0
    %582 = vmatmul.mubr.bf16.gmra.mxu0 %v124
    %v583 = vpop.f32.mrf.mxu0
    %v584 = vadd.f32 0.0, %v583
    %v585 = vpop.f32.mrf.mxu0
    %v586 = vpop.f32.mrf.mxu0
    %v587 = vadd.f32 0.0, %v586
    %v588 = vpop.f32.mrf.mxu0
    %589 = vmatprep.mubr.bf16.mxu0 0
    %590 = vmatmul.mubr.bf16.gmra.mxu0 %v125
    %v591 = vpop.f32.mrf.mxu0
    %v592 = vadd.f32 0.0, %v591
    %v593 = vpop.f32.mrf.mxu0
    %v594 = vpop.f32.mrf.mxu0
    %v595 = vadd.f32 0.0, %v594
    %v596 = vpop.f32.mrf.mxu0
    %597 = vmatprep.mubr.bf16.mxu0 0
    %598 = vmatmul.mubr.bf16.gmra.mxu0 %v126
    %v599 = vpop.f32.mrf.mxu0
    %v600 = vadd.f32 0.0, %v599
    %v601 = vpop.f32.mrf.mxu0
    %v602 = vpop.f32.mrf.mxu0
    %v603 = vadd.f32 0.0, %v602
    %v604 = vpop.f32.mrf.mxu0
    %605 = vmatprep.mubr.bf16.mxu0 0
    %606 = vmatmul.mubr.bf16.gmra.mxu0 %v127
    %v607 = vpop.f32.mrf.mxu0
    %v608 = vadd.f32 0.0, %v607
    %v609 = vpop.f32.mrf.mxu0
    %v610 = vpop.f32.mrf.mxu0
    %v611 = vadd.f32 0.0, %v610
    %v612 = vpop.f32.mrf.mxu0
    %613 = vmatprep.mubr.bf16.mxu0 0
    %614 = vmatmul.mubr.bf16.gmra.mxu0 %v128
    %v615 = vpop.f32.mrf.mxu0
    %v616 = vadd.f32 0.0, %v615
    %v617 = vpop.f32.mrf.mxu0
    %v618 = vpop.f32.mrf.mxu0
    %v619 = vadd.f32 0.0, %v618
    %v620 = vpop.f32.mrf.mxu0
    %621 = vmatprep.mubr.bf16.mxu0 0
    %622 = vmatmul.mubr.bf16.gmra.mxu0 %v129
    %v623 = vpop.f32.mrf.mxu0
    %v624 = vadd.f32 0.0, %v623
    %v625 = vpop.f32.mrf.mxu0
    %v626 = vpop.f32.mrf.mxu0
    %v627 = vadd.f32 0.0, %v626
    %v628 = vpop.f32.mrf.mxu0
    %629 = vmatprep.mubr.bf16.mxu0 0
    %630 = vmatmul.mubr.bf16.gmra.mxu0 %v130
    %v631 = vpop.f32.mrf.mxu0
    %v632 = vadd.f32 0.0, %v631
    %v633 = vpop.f32.mrf.mxu0
    %v634 = vpop.f32.mrf.mxu0
    %v635 = vadd.f32 0.0, %v634
    %v636 = vpop.f32.mrf.mxu0
    %637 = vmatprep.mubr.bf16.mxu0 0
    %638 = vmatmul.mubr.bf16.gmra.mxu0 %v131
    %v639 = vpop.f32.mrf.mxu0
    %v640 = vadd.f32 0.0, %v639
    %v641 = vpop.f32.mrf.mxu0
    %v642 = vpop.f32.mrf.mxu0
    %v643 = vadd.f32 0.0, %v642
    %v644 = vpop.f32.mrf.mxu0
    %645 = vdwg.mxu0
    %v646 = vpack.c.bf16 %v587, %v584
    %v647 = vpack.c.bf16 %v595, %v592
    %v648 = vpack.c.bf16 %v603, %v600
    %v649 = vpack.c.bf16 %v611, %v608
    %v650 = vpack.c.bf16 %v619, %v616
    %v651 = vpack.c.bf16 %v627, %v624
    %v652 = vpack.c.bf16 %v635, %v632
    %v653 = vpack.c.bf16 %v643, %v640
    %s654 = scalar_lea.vmem [#allocation7], 128
    %v655 = vld [vmem:[%s654] sm:$0xf]
    %v656 = vld [vmem:[%s654 + $0x4] sm:$0xf]
    %v657 = vld [vmem:[%s654 + $0x8] sm:$0xf]
    %v658 = vld [vmem:[%s654 + $0xc] sm:$0xf]
    %v659 = vld [vmem:[%s654 + $0x10] sm:$0xf]
    %v660 = vld [vmem:[%s654 + $0x14] sm:$0xf]
    %v661 = vld [vmem:[%s654 + $0x18] sm:$0xf]
    %v662 = vld [vmem:[%s654 + $0x1c] sm:$0xf]
    %v663 = vld [vmem:[%s654 + $0x20] sm:$0xf]
    %v664 = vld [vmem:[%s654 + $0x24] sm:$0xf]
    %v665 = vld [vmem:[%s654 + $0x28] sm:$0xf]
    %v666 = vld [vmem:[%s654 + $0x2c] sm:$0xf]
    %v667 = vld [vmem:[%s654 + $0x30] sm:$0xf]
    %v668 = vld [vmem:[%s654 + $0x34] sm:$0xf]
    %v669 = vld [vmem:[%s654 + $0x38] sm:$0xf]
    %v670 = vld [vmem:[%s654 + $0x3c] sm:$0xf]
    %v671 = vld [vmem:[%s654 + $0x40] sm:$0xf]
    %v672 = vld [vmem:[%s654 + $0x44] sm:$0xf]
    %v673 = vld [vmem:[%s654 + $0x48] sm:$0xf]
    %v674 = vld [vmem:[%s654 + $0x4c] sm:$0xf]
    %v675 = vld [vmem:[%s654 + $0x50] sm:$0xf]
    %v676 = vld [vmem:[%s654 + $0x54] sm:$0xf]
    %v677 = vld [vmem:[%s654 + $0x58] sm:$0xf]
    %v678 = vld [vmem:[%s654 + $0x5c] sm:$0xf]
    %v679 = vld [vmem:[%s654 + $0x60] sm:$0xf]
    %v680 = vld [vmem:[%s654 + $0x64] sm:$0xf]
    %v681 = vld [vmem:[%s654 + $0x68] sm:$0xf]
    %v682 = vld [vmem:[%s654 + $0x6c] sm:$0xf]
    %v683 = vld [vmem:[%s654 + $0x70] sm:$0xf]
    %v684 = vld [vmem:[%s654 + $0x74] sm:$0xf]
    %v685 = vld [vmem:[%s654 + $0x78] sm:$0xf]
    %v686 = vld [vmem:[%s654 + $0x7c] sm:$0xf]
    %s687 = scalar_lea.vmem %s3, 1
    %v688 = vld [vmem:[%s687] sm:$0x1]
    %v690 = vlaneseq
    %v691 = vshrl.u32 %v690, 7
    %v692 = vsub.s32 0, %v691
    %v693 = vrot.slane %v688, %v692
    %v727 = vunpack.c.l.b16 %v655
    %v728 = vunpack.c.l.b16 %v656
    %v729 = vunpack.c.l.b16 %v657
    %v730 = vunpack.c.l.b16 %v658
    %v731 = vunpack.c.l.b16 %v659
    %v732 = vunpack.c.l.b16 %v660
    %v733 = vunpack.c.l.b16 %v661
    %v734 = vunpack.c.l.b16 %v662
    %v735 = vunpack.c.l.b16 %v663
    %v736 = vunpack.c.l.b16 %v664
    %v737 = vunpack.c.l.b16 %v665
    %v738 = vunpack.c.l.b16 %v666
    %v739 = vunpack.c.l.b16 %v667
    %v740 = vunpack.c.l.b16 %v668
    %v741 = vunpack.c.l.b16 %v669
    %v742 = vunpack.c.l.b16 %v670
    %v743 = vunpack.c.l.b16 %v671
    %v744 = vunpack.c.l.b16 %v672
    %v745 = vunpack.c.l.b16 %v673
    %v746 = vunpack.c.l.b16 %v674
    %v747 = vunpack.c.l.b16 %v675
    %v748 = vunpack.c.l.b16 %v676
    %v749 = vunpack.c.l.b16 %v677
    %v750 = vunpack.c.l.b16 %v678
    %v751 = vunpack.c.l.b16 %v679
    %v752 = vunpack.c.l.b16 %v680
    %v753 = vunpack.c.l.b16 %v681
    %v754 = vunpack.c.l.b16 %v682
    %v755 = vunpack.c.l.b16 %v683
    %v756 = vunpack.c.l.b16 %v684
    %v757 = vunpack.c.l.b16 %v685
    %v758 = vunpack.c.l.b16 %v686
    %v759 = vpack.c.b16 %v728, %v727
    %v760 = vpack.c.b16 %v730, %v729
    %v761 = vpack.c.b16 %v732, %v731
    %v762 = vpack.c.b16 %v734, %v733
    %v763 = vpack.c.b16 %v736, %v735
    %v764 = vpack.c.b16 %v738, %v737
    %v765 = vpack.c.b16 %v740, %v739
    %v766 = vpack.c.b16 %v742, %v741
    %v767 = vpack.c.b16 %v744, %v743
    %v768 = vpack.c.b16 %v746, %v745
    %v769 = vpack.c.b16 %v748, %v747
    %v770 = vpack.c.b16 %v750, %v749
    %v771 = vpack.c.b16 %v752, %v751
    %v772 = vpack.c.b16 %v754, %v753
    %v773 = vpack.c.b16 %v756, %v755
    %v774 = vpack.c.b16 %v758, %v757
    %791 = vmatprep.subr.bf16.mxu0 0
    %792 = vmatpush1.bf16.msra.mxu0 %v766
    %793 = vmatprep.subr.bf16.mxu0 0
    %794 = vmatpush1.bf16.msra.mxu0 %v765
    %795 = vmatprep.subr.bf16.mxu0 0
    %796 = vmatpush1.bf16.msra.mxu0 %v764
    %797 = vmatprep.subr.bf16.mxu0 0
    %798 = vmatpush1.bf16.msra.mxu0 %v763
    %799 = vmatprep.subr.bf16.mxu0 0
    %800 = vmatpush1.bf16.msra.mxu0 %v762
    %801 = vmatprep.subr.bf16.mxu0 0
    %802 = vmatpush1.bf16.msra.mxu0 %v761
    %803 = vmatprep.subr.bf16.mxu0 0
    %804 = vmatpush1.bf16.msra.mxu0 %v760
    %805 = vmatprep.subr.bf16.mxu0 0
    %806 = vmatpush1.bf16.msra.mxu0 %v759
    %807 = vmatprep.subr.bf16.mxu0 0
    %808 = vmatpush2.bf16.msra.mxu0 %v774
    %809 = vmatprep.subr.bf16.mxu0 0
    %810 = vmatpush2.bf16.msra.mxu0 %v773
    %811 = vmatprep.subr.bf16.mxu0 0
    %812 = vmatpush2.bf16.msra.mxu0 %v772
    %813 = vmatprep.subr.bf16.mxu0 0
    %814 = vmatpush2.bf16.msra.mxu0 %v771
    %815 = vmatprep.subr.bf16.mxu0 0
    %816 = vmatpush2.bf16.msra.mxu0 %v770
    %817 = vmatprep.subr.bf16.mxu0 0
    %818 = vmatpush2.bf16.msra.mxu0 %v769
    %819 = vmatprep.subr.bf16.mxu0 0
    %820 = vmatpush2.bf16.msra.mxu0 %v768
    %821 = vmatprep.subr.bf16.mxu0 0
    %822 = vmatpush2.bf16.msra.mxu0 %v767
    %823 = vmatprep.mubr.bf16.mxu0 %v541
    %824 = vmatmul.mubr.bf16.gmra.mxu0 %v646
    %v825 = vpop.f32.mrf.mxu0
    %v826 = vadd.f32 %v693, %v825
    %v827 = vpop.f32.mrf.mxu0
    %v828 = vpop.f32.mrf.mxu0
    %v829 = vadd.f32 %v693, %v828
    %v830 = vpop.f32.mrf.mxu0
    %831 = vmatprep.mubr.bf16.mxu0 %v542
    %832 = vmatmul.mubr.bf16.gmra.mxu0 %v647
    %v833 = vpop.f32.mrf.mxu0
    %v834 = vadd.f32 %v693, %v833
    %v835 = vpop.f32.mrf.mxu0
    %v836 = vpop.f32.mrf.mxu0
    %v837 = vadd.f32 %v693, %v836
    %v838 = vpop.f32.mrf.mxu0
    %839 = vmatprep.mubr.bf16.mxu0 %v543
    %840 = vmatmul.mubr.bf16.gmra.mxu0 %v648
    %v841 = vpop.f32.mrf.mxu0
    %v842 = vadd.f32 %v693, %v841
    %v843 = vpop.f32.mrf.mxu0
    %v844 = vpop.f32.mrf.mxu0
    %v845 = vadd.f32 %v693, %v844
    %v846 = vpop.f32.mrf.mxu0
    %847 = vmatprep.mubr.bf16.mxu0 %v544
    %848 = vmatmul.mubr.bf16.gmra.mxu0 %v649
    %v849 = vpop.f32.mrf.mxu0
    %v850 = vadd.f32 %v693, %v849
    %v851 = vpop.f32.mrf.mxu0
    %v852 = vpop.f32.mrf.mxu0
    %v853 = vadd.f32 %v693, %v852
    %v854 = vpop.f32.mrf.mxu0
    %855 = vmatprep.mubr.bf16.mxu0 %v545
    %856 = vmatmul.mubr.bf16.gmra.mxu0 %v650
    %v857 = vpop.f32.mrf.mxu0
    %v858 = vadd.f32 %v693, %v857
    %v859 = vpop.f32.mrf.mxu0
    %v860 = vpop.f32.mrf.mxu0
    %v861 = vadd.f32 %v693, %v860
    %v862 = vpop.f32.mrf.mxu0
    %863 = vmatprep.mubr.bf16.mxu0 %v546
    %864 = vmatmul.mubr.bf16.gmra.mxu0 %v651
    %v865 = vpop.f32.mrf.mxu0
    %v866 = vadd.f32 %v693, %v865
    %v867 = vpop.f32.mrf.mxu0
    %v868 = vpop.f32.mrf.mxu0
    %v869 = vadd.f32 %v693, %v868
    %v870 = vpop.f32.mrf.mxu0
    %871 = vmatprep.mubr.bf16.mxu0 %v547
    %872 = vmatmul.mubr.bf16.gmra.mxu0 %v652
    %v873 = vpop.f32.mrf.mxu0
    %v874 = vadd.f32 %v693, %v873
    %v875 = vpop.f32.mrf.mxu0
    %v876 = vpop.f32.mrf.mxu0
    %v877 = vadd.f32 %v693, %v876
    %v878 = vpop.f32.mrf.mxu0
    %879 = vmatprep.mubr.bf16.mxu0 %v548
    %880 = vmatmul.mubr.bf16.gmra.mxu0 %v653
    %v881 = vpop.f32.mrf.mxu0
    %v882 = vadd.f32 %v693, %v881
    %v883 = vpop.f32.mrf.mxu0
    %v884 = vpop.f32.mrf.mxu0
    %v885 = vadd.f32 %v693, %v884
    %v886 = vpop.f32.mrf.mxu0
    %887 = vdwg.mxu0
    %v888 = vmax.f32 %v826, 0.0
    %v889 = vmax.f32 %v829, 0.0
    %v890 = vmax.f32 %v834, 0.0
    %v891 = vmax.f32 %v837, 0.0
    %v892 = vmax.f32 %v842, 0.0
    %v893 = vmax.f32 %v845, 0.0
    %v894 = vmax.f32 %v850, 0.0
    %v895 = vmax.f32 %v853, 0.0
    %v896 = vmax.f32 %v858, 0.0
    %v897 = vmax.f32 %v861, 0.0
    %v898 = vmax.f32 %v866, 0.0
    %v899 = vmax.f32 %v869, 0.0
    %v900 = vmax.f32 %v874, 0.0
    %v901 = vmax.f32 %v877, 0.0
    %v902 = vmax.f32 %v882, 0.0
    %v903 = vmax.f32 %v885, 0.0
    %v904 = vpack.c.bf16 %v889, %v888
    %v905 = vpack.c.bf16 %v891, %v890
    %v906 = vpack.c.bf16 %v893, %v892
    %v907 = vpack.c.bf16 %v895, %v894
    %v908 = vpack.c.bf16 %v897, %v896
    %v909 = vpack.c.bf16 %v899, %v898
    %v910 = vpack.c.bf16 %v901, %v900
    %v911 = vpack.c.bf16 %v903, %v902
    %912 = vmatprep.subr.bf16.mxu0 0
    %913 = vmatpush1.bf16.msra.mxu0 %v911
    %914 = vmatprep.subr.bf16.mxu0 0
    %915 = vmatpush1.bf16.msra.mxu0 %v910
    %916 = vmatprep.subr.bf16.mxu0 0
    %917 = vmatpush1.bf16.msra.mxu0 %v909
    %918 = vmatprep.subr.bf16.mxu0 0
    %919 = vmatpush1.bf16.msra.mxu0 %v908
    %920 = vmatprep.subr.bf16.mxu0 0
    %921 = vmatpush1.bf16.msra.mxu0 %v907
    %922 = vmatprep.subr.bf16.mxu0 0
    %923 = vmatpush1.bf16.msra.mxu0 %v906
    %924 = vmatprep.subr.bf16.mxu0 0
    %925 = vmatpush1.bf16.msra.mxu0 %v905
    %926 = vmatprep.subr.bf16.mxu0 0
    %927 = vmatpush1.bf16.msra.mxu0 %v904
    %928 = vmatprep.subr.bf16.mxu0 0
    %929 = vmatpush2.bf16.msra.mxu0 0
    %930 = vmatprep.subr.bf16.mxu0 0
    %931 = vmatpush2.bf16.msra.mxu0 0
    %932 = vmatprep.subr.bf16.mxu0 0
    %933 = vmatpush2.bf16.msra.mxu0 0
    %934 = vmatprep.subr.bf16.mxu0 0
    %935 = vmatpush2.bf16.msra.mxu0 0
    %936 = vmatprep.subr.bf16.mxu0 0
    %937 = vmatpush2.bf16.msra.mxu0 0
    %938 = vmatprep.subr.bf16.mxu0 0
    %939 = vmatpush2.bf16.msra.mxu0 0
    %940 = vmatprep.subr.bf16.mxu0 0
    %941 = vmatpush2.bf16.msra.mxu0 0
    %942 = vmatprep.subr.bf16.mxu0 0
    %943 = vmatpush2.bf16.msra.mxu0 0
    %944 = vmatprep.mubr.bf16.mxu0 0
    %945 = vmatmul.mubr.bf16.gmra.mxu0 %v124
    %v946 = vpop.f32.mrf.mxu0
    %v947 = vadd.f32 0.0, %v946
    %v948 = vpop.f32.mrf.mxu0
    %v949 = vpop.f32.mrf.mxu0
    %v950 = vadd.f32 0.0, %v949
    %v951 = vpop.f32.mrf.mxu0
    %952 = vmatprep.mubr.bf16.mxu0 0
    %953 = vmatmul.mubr.bf16.gmra.mxu0 %v125
    %v954 = vpop.f32.mrf.mxu0
    %v955 = vadd.f32 0.0, %v954
    %v956 = vpop.f32.mrf.mxu0
    %v957 = vpop.f32.mrf.mxu0
    %v958 = vadd.f32 0.0, %v957
    %v959 = vpop.f32.mrf.mxu0
    %960 = vmatprep.mubr.bf16.mxu0 0
    %961 = vmatmul.mubr.bf16.gmra.mxu0 %v126
    %v962 = vpop.f32.mrf.mxu0
    %v963 = vadd.f32 0.0, %v962
    %v964 = vpop.f32.mrf.mxu0
    %v965 = vpop.f32.mrf.mxu0
    %v966 = vadd.f32 0.0, %v965
    %v967 = vpop.f32.mrf.mxu0
    %968 = vmatprep.mubr.bf16.mxu0 0
    %969 = vmatmul.mubr.bf16.gmra.mxu0 %v127
    %v970 = vpop.f32.mrf.mxu0
    %v971 = vadd.f32 0.0, %v970
    %v972 = vpop.f32.mrf.mxu0
    %v973 = vpop.f32.mrf.mxu0
    %v974 = vadd.f32 0.0, %v973
    %v975 = vpop.f32.mrf.mxu0
    %976 = vmatprep.mubr.bf16.mxu0 0
    %977 = vmatmul.mubr.bf16.gmra.mxu0 %v128
    %v978 = vpop.f32.mrf.mxu0
    %v979 = vadd.f32 0.0, %v978
    %v980 = vpop.f32.mrf.mxu0
    %v981 = vpop.f32.mrf.mxu0
    %v982 = vadd.f32 0.0, %v981
    %v983 = vpop.f32.mrf.mxu0
    %984 = vmatprep.mubr.bf16.mxu0 0
    %985 = vmatmul.mubr.bf16.gmra.mxu0 %v129
    %v986 = vpop.f32.mrf.mxu0
    %v987 = vadd.f32 0.0, %v986
    %v988 = vpop.f32.mrf.mxu0
    %v989 = vpop.f32.mrf.mxu0
    %v990 = vadd.f32 0.0, %v989
    %v991 = vpop.f32.mrf.mxu0
    %992 = vmatprep.mubr.bf16.mxu0 0
    %993 = vmatmul.mubr.bf16.gmra.mxu0 %v130
    %v994 = vpop.f32.mrf.mxu0
    %v995 = vadd.f32 0.0, %v994
    %v996 = vpop.f32.mrf.mxu0
    %v997 = vpop.f32.mrf.mxu0
    %v998 = vadd.f32 0.0, %v997
    %v999 = vpop.f32.mrf.mxu0
    %1000 = vmatprep.mubr.bf16.mxu0 0
    %1001 = vmatmul.mubr.bf16.gmra.mxu0 %v131
    %v1002 = vpop.f32.mrf.mxu0
    %v1003 = vadd.f32 0.0, %v1002
    %v1004 = vpop.f32.mrf.mxu0
    %v1005 = vpop.f32.mrf.mxu0
    %v1006 = vadd.f32 0.0, %v1005
    %v1007 = vpop.f32.mrf.mxu0
    %1008 = vdwg.mxu0
    %v1009 = vpack.c.bf16 %v950, %v947
    %v1010 = vpack.c.bf16 %v958, %v955
    %v1011 = vpack.c.bf16 %v966, %v963
    %v1012 = vpack.c.bf16 %v974, %v971
    %v1013 = vpack.c.bf16 %v982, %v979
    %v1014 = vpack.c.bf16 %v990, %v987
    %v1015 = vpack.c.bf16 %v998, %v995
    %v1016 = vpack.c.bf16 %v1006, %v1003
    %s1017 = scalar_lea.vmem [#allocation7], 256
    %v1018 = vld [vmem:[%s1017] sm:$0xf]
    %v1019 = vld [vmem:[%s1017 + $0x4] sm:$0xf]
    %v1020 = vld [vmem:[%s1017 + $0x8] sm:$0xf]
    %v1021 = vld [vmem:[%s1017 + $0xc] sm:$0xf]
    %v1022 = vld [vmem:[%s1017 + $0x10] sm:$0xf]
    %v1023 = vld [vmem:[%s1017 + $0x14] sm:$0xf]
    %v1024 = vld [vmem:[%s1017 + $0x18] sm:$0xf]
    %v1025 = vld [vmem:[%s1017 + $0x1c] sm:$0xf]
    %v1026 = vld [vmem:[%s1017 + $0x20] sm:$0xf]
    %v1027 = vld [vmem:[%s1017 + $0x24] sm:$0xf]
    %v1028 = vld [vmem:[%s1017 + $0x28] sm:$0xf]
    %v1029 = vld [vmem:[%s1017 + $0x2c] sm:$0xf]
    %v1030 = vld [vmem:[%s1017 + $0x30] sm:$0xf]
    %v1031 = vld [vmem:[%s1017 + $0x34] sm:$0xf]
    %v1032 = vld [vmem:[%s1017 + $0x38] sm:$0xf]
    %v1033 = vld [vmem:[%s1017 + $0x3c] sm:$0xf]
    %v1034 = vld [vmem:[%s1017 + $0x40] sm:$0xf]
    %v1035 = vld [vmem:[%s1017 + $0x44] sm:$0xf]
    %v1036 = vld [vmem:[%s1017 + $0x48] sm:$0xf]
    %v1037 = vld [vmem:[%s1017 + $0x4c] sm:$0xf]
    %v1038 = vld [vmem:[%s1017 + $0x50] sm:$0xf]
    %v1039 = vld [vmem:[%s1017 + $0x54] sm:$0xf]
    %v1040 = vld [vmem:[%s1017 + $0x58] sm:$0xf]
    %v1041 = vld [vmem:[%s1017 + $0x5c] sm:$0xf]
    %v1042 = vld [vmem:[%s1017 + $0x60] sm:$0xf]
    %v1043 = vld [vmem:[%s1017 + $0x64] sm:$0xf]
    %v1044 = vld [vmem:[%s1017 + $0x68] sm:$0xf]
    %v1045 = vld [vmem:[%s1017 + $0x6c] sm:$0xf]
    %v1046 = vld [vmem:[%s1017 + $0x70] sm:$0xf]
    %v1047 = vld [vmem:[%s1017 + $0x74] sm:$0xf]
    %v1048 = vld [vmem:[%s1017 + $0x78] sm:$0xf]
    %v1049 = vld [vmem:[%s1017 + $0x7c] sm:$0xf]
    %s1050 = scalar_lea.vmem %s3, 2
    %v1051 = vld [vmem:[%s1050] sm:$0x1]
    %v1053 = vlaneseq
    %v1054 = vshrl.u32 %v1053, 7
    %v1055 = vsub.s32 0, %v1054
    %v1056 = vrot.slane %v1051, %v1055
    %v1090 = vunpack.c.l.b16 %v1018
    %v1091 = vunpack.c.l.b16 %v1019
    %v1092 = vunpack.c.l.b16 %v1020
    %v1093 = vunpack.c.l.b16 %v1021
    %v1094 = vunpack.c.l.b16 %v1022
    %v1095 = vunpack.c.l.b16 %v1023
    %v1096 = vunpack.c.l.b16 %v1024
    %v1097 = vunpack.c.l.b16 %v1025
    %v1098 = vunpack.c.l.b16 %v1026
    %v1099 = vunpack.c.l.b16 %v1027
    %v1100 = vunpack.c.l.b16 %v1028
    %v1101 = vunpack.c.l.b16 %v1029
    %v1102 = vunpack.c.l.b16 %v1030
    %v1103 = vunpack.c.l.b16 %v1031
    %v1104 = vunpack.c.l.b16 %v1032
    %v1105 = vunpack.c.l.b16 %v1033
    %v1106 = vunpack.c.l.b16 %v1034
    %v1107 = vunpack.c.l.b16 %v1035
    %v1108 = vunpack.c.l.b16 %v1036
    %v1109 = vunpack.c.l.b16 %v1037
    %v1110 = vunpack.c.l.b16 %v1038
    %v1111 = vunpack.c.l.b16 %v1039
    %v1112 = vunpack.c.l.b16 %v1040
    %v1113 = vunpack.c.l.b16 %v1041
    %v1114 = vunpack.c.l.b16 %v1042
    %v1115 = vunpack.c.l.b16 %v1043
    %v1116 = vunpack.c.l.b16 %v1044
    %v1117 = vunpack.c.l.b16 %v1045
    %v1118 = vunpack.c.l.b16 %v1046
    %v1119 = vunpack.c.l.b16 %v1047
    %v1120 = vunpack.c.l.b16 %v1048
    %v1121 = vunpack.c.l.b16 %v1049
    %v1122 = vpack.c.b16 %v1091, %v1090
    %v1123 = vpack.c.b16 %v1093, %v1092
    %v1124 = vpack.c.b16 %v1095, %v1094
    %v1125 = vpack.c.b16 %v1097, %v1096
    %v1126 = vpack.c.b16 %v1099, %v1098
    %v1127 = vpack.c.b16 %v1101, %v1100
    %v1128 = vpack.c.b16 %v1103, %v1102
    %v1129 = vpack.c.b16 %v1105, %v1104
    %v1130 = vpack.c.b16 %v1107, %v1106
    %v1131 = vpack.c.b16 %v1109, %v1108
    %v1132 = vpack.c.b16 %v1111, %v1110
    %v1133 = vpack.c.b16 %v1113, %v1112
    %v1134 = vpack.c.b16 %v1115, %v1114
    %v1135 = vpack.c.b16 %v1117, %v1116
    %v1136 = vpack.c.b16 %v1119, %v1118
    %v1137 = vpack.c.b16 %v1121, %v1120
    %1154 = vmatprep.subr.bf16.mxu0 0
    %1155 = vmatpush1.bf16.msra.mxu0 %v1129
    %1156 = vmatprep.subr.bf16.mxu0 0
    %1157 = vmatpush1.bf16.msra.mxu0 %v1128
    %1158 = vmatprep.subr.bf16.mxu0 0
    %1159 = vmatpush1.bf16.msra.mxu0 %v1127
    %1160 = vmatprep.subr.bf16.mxu0 0
    %1161 = vmatpush1.bf16.msra.mxu0 %v1126
    %1162 = vmatprep.subr.bf16.mxu0 0
    %1163 = vmatpush1.bf16.msra.mxu0 %v1125
    %1164 = vmatprep.subr.bf16.mxu0 0
    %1165 = vmatpush1.bf16.msra.mxu0 %v1124
    %1166 = vmatprep.subr.bf16.mxu0 0
    %1167 = vmatpush1.bf16.msra.mxu0 %v1123
    %1168 = vmatprep.subr.bf16.mxu0 0
    %1169 = vmatpush1.bf16.msra.mxu0 %v1122
    %1170 = vmatprep.subr.bf16.mxu0 0
    %1171 = vmatpush2.bf16.msra.mxu0 %v1137
    %1172 = vmatprep.subr.bf16.mxu0 0
    %1173 = vmatpush2.bf16.msra.mxu0 %v1136
    %1174 = vmatprep.subr.bf16.mxu0 0
    %1175 = vmatpush2.bf16.msra.mxu0 %v1135
    %1176 = vmatprep.subr.bf16.mxu0 0
    %1177 = vmatpush2.bf16.msra.mxu0 %v1134
    %1178 = vmatprep.subr.bf16.mxu0 0
    %1179 = vmatpush2.bf16.msra.mxu0 %v1133
    %1180 = vmatprep.subr.bf16.mxu0 0
    %1181 = vmatpush2.bf16.msra.mxu0 %v1132
    %1182 = vmatprep.subr.bf16.mxu0 0
    %1183 = vmatpush2.bf16.msra.mxu0 %v1131
    %1184 = vmatprep.subr.bf16.mxu0 0
    %1185 = vmatpush2.bf16.msra.mxu0 %v1130
    %1186 = vmatprep.mubr.bf16.mxu0 %v904
    %1187 = vmatmul.mubr.bf16.gmra.mxu0 %v1009
    %v1188 = vpop.f32.mrf.mxu0
    %v1189 = vadd.f32 %v1056, %v1188
    %v1190 = vpop.f32.mrf.mxu0
    %v1191 = vpop.f32.mrf.mxu0
    %v1192 = vadd.f32 %v1056, %v1191
    %v1193 = vpop.f32.mrf.mxu0
    %1194 = vmatprep.mubr.bf16.mxu0 %v905
    %1195 = vmatmul.mubr.bf16.gmra.mxu0 %v1010
    %v1196 = vpop.f32.mrf.mxu0
    %v1197 = vadd.f32 %v1056, %v1196
    %v1198 = vpop.f32.mrf.mxu0
    %v1199 = vpop.f32.mrf.mxu0
    %v1200 = vadd.f32 %v1056, %v1199
    %v1201 = vpop.f32.mrf.mxu0
    %1202 = vmatprep.mubr.bf16.mxu0 %v906
    %1203 = vmatmul.mubr.bf16.gmra.mxu0 %v1011
    %v1204 = vpop.f32.mrf.mxu0
    %v1205 = vadd.f32 %v1056, %v1204
    %v1206 = vpop.f32.mrf.mxu0
    %v1207 = vpop.f32.mrf.mxu0
    %v1208 = vadd.f32 %v1056, %v1207
    %v1209 = vpop.f32.mrf.mxu0
    %1210 = vmatprep.mubr.bf16.mxu0 %v907
    %1211 = vmatmul.mubr.bf16.gmra.mxu0 %v1012
    %v1212 = vpop.f32.mrf.mxu0
    %v1213 = vadd.f32 %v1056, %v1212
    %v1214 = vpop.f32.mrf.mxu0
    %v1215 = vpop.f32.mrf.mxu0
    %v1216 = vadd.f32 %v1056, %v1215
    %v1217 = vpop.f32.mrf.mxu0
    %1218 = vmatprep.mubr.bf16.mxu0 %v908
    %1219 = vmatmul.mubr.bf16.gmra.mxu0 %v1013
    %v1220 = vpop.f32.mrf.mxu0
    %v1221 = vadd.f32 %v1056, %v1220
    %v1222 = vpop.f32.mrf.mxu0
    %v1223 = vpop.f32.mrf.mxu0
    %v1224 = vadd.f32 %v1056, %v1223
    %v1225 = vpop.f32.mrf.mxu0
    %1226 = vmatprep.mubr.bf16.mxu0 %v909
    %1227 = vmatmul.mubr.bf16.gmra.mxu0 %v1014
    %v1228 = vpop.f32.mrf.mxu0
    %v1229 = vadd.f32 %v1056, %v1228
    %v1230 = vpop.f32.mrf.mxu0
    %v1231 = vpop.f32.mrf.mxu0
    %v1232 = vadd.f32 %v1056, %v1231
    %v1233 = vpop.f32.mrf.mxu0
    %1234 = vmatprep.mubr.bf16.mxu0 %v910
    %1235 = vmatmul.mubr.bf16.gmra.mxu0 %v1015
    %v1236 = vpop.f32.mrf.mxu0
    %v1237 = vadd.f32 %v1056, %v1236
    %v1238 = vpop.f32.mrf.mxu0
    %v1239 = vpop.f32.mrf.mxu0
    %v1240 = vadd.f32 %v1056, %v1239
    %v1241 = vpop.f32.mrf.mxu0
    %1242 = vmatprep.mubr.bf16.mxu0 %v911
    %1243 = vmatmul.mubr.bf16.gmra.mxu0 %v1016
    %v1244 = vpop.f32.mrf.mxu0
    %v1245 = vadd.f32 %v1056, %v1244
    %v1246 = vpop.f32.mrf.mxu0
    %v1247 = vpop.f32.mrf.mxu0
    %v1248 = vadd.f32 %v1056, %v1247
    %v1249 = vpop.f32.mrf.mxu0
    %1250 = vdwg.mxu0
    %1251 = vst [vmem:[#allocation8] sm:$0xff] %v1189
    %1252 = vst [vmem:[#allocation8 + $0x8] sm:$0xff] %v1192
    %1253 = vst [vmem:[#allocation8 + $0x10] sm:$0xff] %v1197
    %1254 = vst [vmem:[#allocation8 + $0x18] sm:$0xff] %v1200
    %1255 = vst [vmem:[#allocation8 + $0x20] sm:$0xff] %v1205
    %1256 = vst [vmem:[#allocation8 + $0x28] sm:$0xff] %v1208
    %1257 = vst [vmem:[#allocation8 + $0x30] sm:$0xff] %v1213
    %1258 = vst [vmem:[#allocation8 + $0x38] sm:$0xff] %v1216
    %1259 = vst [vmem:[#allocation8 + $0x40] sm:$0xff] %v1221
    %1260 = vst [vmem:[#allocation8 + $0x48] sm:$0xff] %v1224
    %1261 = vst [vmem:[#allocation8 + $0x50] sm:$0xff] %v1229
    %1262 = vst [vmem:[#allocation8 + $0x58] sm:$0xff] %v1232
    %1263 = vst [vmem:[#allocation8 + $0x60] sm:$0xff] %v1237
    %1264 = vst [vmem:[#allocation8 + $0x68] sm:$0xff] %v1240
    %1265 = vst [vmem:[#allocation8 + $0x70] sm:$0xff] %v1245
    %1266 = vst [vmem:[#allocation8 + $0x78] sm:$0xff] %v1248
    // Predicated region
    $region30: #{tpu_custom_call.1} parent=1 // pred_check
      _
    $region31: #{tpu_custom_call.1} parent=1 // pred_check_branch
      %1268 = sbr.rel (0) target = $region33
    $region32: #{tpu_custom_call.1} parent=1 // pred_region
      %s1270 = ssub.s32 2048, 2048
      %1271 = vsyncadd [#allocation4], %s1270
      %s1272 = sshll.u32 [#allocation8], 4
      %s1273 = int_to_ptr.vmem [resolvable:$true] %s1272
      %1278 = dma.vmem_to_hbm [thread:$0]  %s1273, 2048, %s4, [#allocation4], 128, 128, 8
    $region33: #{tpu_custom_call.1} parent=1 // pred_fallthru
      _
    // Predicated region
    $region34: #{tpu_custom_call.1} parent=1 // pred_check
      _
    $region35: #{tpu_custom_call.1} parent=1 // pred_check_branch
      %1280 = sbr.rel (0) target = $region37
    $region36: #{tpu_custom_call.1} parent=1 // pred_region
      %1281 = dma.done [#allocation4], 2048
    $region37: #{tpu_custom_call.1} parent=1 // pred_fallthru
      _
    %1282 = vsyncpa [#allocation3], 1
    %1283 = vsyncpa [#allocation6], 1
    %1284 = vsyncpa [#allocation4], 1

</llo_original>
